<compile_context>
chip_gen: v7x
topology: tpu7x:2x2x1
jax: 0.10.0
libtpu: 0.0.40
codegen_flags: <defaults>
</compile_context>

<pallas_src>
import jax
import jax.numpy as jnp
from jax.experimental import pallas as pl
from jax.experimental.pallas import tpu as pltpu


def softmax_loss_kernel(x_ref, w_ref, b_ref, label_ref, out_ref,
                        xn_sc, m_sc, l_sc, tgt_sc, idx_sc):
    ci = pl.program_id(1)
    last_c = pl.num_programs(1) - 1

    # ---- per-batch-tile init (first class tile): normalize + reset accumulators ----
    @pl.when(ci == 0)
    def _init():
        x = x_ref[...]                                           # (tb, E) f32
        sumsq = jnp.sum(x * x, axis=1, keepdims=True)            # (tb, 1)
        # 1/max(||x||, 1e-12) == rsqrt(max(||x||^2, 1e-24)); EUP op, not a VPU divide.
        inv_norm = jax.lax.rsqrt(jnp.maximum(sumsq, 1e-24))
        xn_sc[...] = (x * inv_norm).astype(xn_sc.dtype)          # bf16 MXU operand
        m_sc[...] = jnp.full_like(m_sc, -jnp.inf)
        l_sc[...] = jnp.zeros_like(l_sc)
        tgt_sc[...] = jnp.zeros_like(tgt_sc)
        idx_sc[...] = jnp.zeros_like(idx_sc)

    # ---- logits tile: (tb, tc) = x_n @ W_tile.T + b_tile ----
    # bf16 x bf16 -> f32 accumulation on the MXU; contraction on dim 1 of both
    # operands so the nn.Linear weight feeds the MXU without an in-kernel transpose.
    logits = jax.lax.dot_general(
        xn_sc[...], w_ref[...],
        dimension_numbers=(((1,), (1,)), ((), ())),
        preferred_element_type=jnp.float32) + b_ref[...]

    tb, tc = logits.shape
    lane = jax.lax.broadcasted_iota(jnp.int32, (tb, tc), 1)      # local class index
    lbl_local = label_ref[...] - ci * tc                          # (tb, 1) shifted label

    # ---- online logsumexp update ----
    tile_max = jnp.max(logits, axis=1, keepdims=True)            # (tb, 1)
    m_old = m_sc[...]
    m_new = jnp.maximum(m_old, tile_max)
    l_sc[...] = (l_sc[...] * jnp.exp(m_old - m_new)
                 + jnp.sum(jnp.exp(logits - m_new), axis=1, keepdims=True))

    # ---- target logit (the label class lives in exactly one class tile) ----
    tgt_sc[...] += jnp.sum(jnp.where(lane == lbl_local, logits, 0.0),
                           axis=1, keepdims=True)

    # ---- online argmax (first occurrence; tile offset added on the (tb,1) result) ----
    tile_arg = jnp.min(
        jnp.where(logits == tile_max, lane, jnp.iinfo(jnp.int32).max),
        axis=1, keepdims=True) + ci * tc
    idx_sc[...] = jnp.where(tile_max > m_old, tile_arg, idx_sc[...])
    m_sc[...] = m_new

    # ---- finalize on the last class tile: one fused (loss, correct) store ----
    @pl.when(ci == last_c)
    def _finalize():
        per_row_loss = (m_sc[...] + jnp.log(l_sc[...])) - tgt_sc[...]
        correct = (idx_sc[...] == label_ref[...]).astype(jnp.float32)
        out_ref[...] = jnp.concatenate([per_row_loss, correct], axis=1)


# ----------------------------------------------------------------------------- helpers


def _vmem_capacity_bytes():
    """Generation-aware VMEM capacity (128 MiB v5e/v6e, 64 MiB v7x per TC)."""
    try:
        return int(pltpu.get_tpu_info().vmem_capacity_bytes)
    except Exception:
        return 64 * 1024 * 1024      # conservative fallback (v7x per-TC size)


def _tensorcores_per_chip():
    try:
        info = pltpu.get_tpu_info()
        for attr in ("num_cores", "core_count", "num_tensorcores",
                     "tensorcores_per_chip"):
            v = getattr(info, attr, None)
            if isinstance(v, int) and v > 0:
                return v
    except Exception:
        pass
    try:
        if "v7" in jax.devices()[0].device_kind.lower():
            return 2
    except Exception:
        pass
    return 1


def _tile_vmem_bytes(tile_b, tile_c, E):
    """Rough per-step VMEM footprint: double-buffered blocks + scratch + live logits."""
    x_blk = 2 * tile_b * E * 4                   # x tile, f32
    w_blk = 2 * tile_c * E * 2                   # weight tile, bf16
    b_blk = 2 * 8 * max(tile_c, 128) * 4         # bias (1, tc), sublane-padded
    lbl_blk = 2 * tile_b * 128 * 4               # label (tb, 1), lane-padded
    out_blk = 2 * tile_b * 128 * 4               # out (tb, 2), lane-padded
    xn = tile_b * E * 2                          # normalized x, bf16
    stats = 4 * tile_b * 128 * 4                 # m / l / tgt / idx, lane-padded
    live = 6 * tile_b * tile_c * 4               # logits + exp/mask temporaries
    return x_blk + w_blk + b_blk + lbl_blk + out_blk + xn + stats + live


def _divisors_from(total, cands):
    out = {t for t in cands if t <= total and total % t == 0}
    out.add(total)                               # fallback: whole dimension in one block
    return sorted(out, reverse=True)


def softmax_head(x, label, weight, bias, *, tile_b=None, tile_c=None):
    """x:(B,E) f32, label:(B,), weight:(C,E), bias:(C,) -> (mean CE loss, top-1 acc %)."""
    B, E = x.shape
    C = weight.shape[0]

    x = x.astype(jnp.float32)
    w_bf16 = weight.astype(jnp.bfloat16)         # halves the dominant HBM stream
    bias2 = bias.reshape(1, C).astype(jnp.float32)
    label2 = label.astype(jnp.int32).reshape(B, 1)

    cap = _vmem_capacity_bytes()
    budget = (cap * 3) // 5                      # headroom for compiler-internal scratch

    if tile_b is None or tile_c is None:
        tb_cands = _divisors_from(B, (1024, 512, 256, 128, 64, 32, 16, 8))
        tc_cands = _divisors_from(C, (4096, 2048, 1024, 512, 256, 128))
        sel_b = sel_c = None
        # tile_b first (it governs weight re-streaming bytes), then the largest
        # class tile that fits; tile_c == C collapses the online softmax to 1 pass.
        for tb in tb_cands:
            for tc in tc_cands:
                if _tile_vmem_bytes(tb, tc, E) <= budget:
                    sel_b, sel_c = tb, tc
                    break
            if sel_b is not None:
                break
        if sel_b is None:                        # pathological shapes: smallest tiles
            sel_b, sel_c = tb_cands[-1], tc_cands[-1]
        # v7x megacore: keep >= 2 batch tiles so the "parallel" axis uses both TCs.
        if (_tensorcores_per_chip() > 1 and B // sel_b < 2 and B % 2 == 0
                and (B // 2) >= 8 and (B // 2) % 8 == 0
                and _tile_vmem_bytes(B // 2, sel_c, E) <= budget):
            sel_b = B // 2
        tile_b = tile_b if tile_b is not None else sel_b
        tile_c = tile_c if tile_c is not None else sel_c

    assert B % tile_b == 0 and C % tile_c == 0, (B, tile_b, C, tile_c)
    nbt, nct = B // tile_b, C // tile_c

    vmem_limit = int(min((cap * 3) // 4,
                         max(2 * _tile_vmem_bytes(tile_b, tile_c, E),
                             32 * 1024 * 1024)))

    # Bytes include weight/bias re-streamed once per batch tile (bf16 weight).
    cost = pl.CostEstimate(
        flops=2 * B * E * C + 10 * B * E + 12 * B * C,
        transcendentals=B * C + B * nct + 3 * B,
        bytes_accessed=(nbt * (C * E * 2 + C * 4)
                        + B * E * 4 + B * 4 + B * 2 * 4),
    )

    rows = pl.pallas_call(
        softmax_loss_kernel,
        out_shape=jax.ShapeDtypeStruct((B, 2), jnp.float32),
        grid_spec=pltpu.PrefetchScalarGridSpec(
            num_scalar_prefetch=0,
            grid=(nbt, nct),
            in_specs=[
                pl.BlockSpec((tile_b, E), lambda bi, ci: (bi, 0)),   # x (f32)
                pl.BlockSpec((tile_c, E), lambda bi, ci: (ci, 0)),   # weight (bf16)
                pl.BlockSpec((1, tile_c), lambda bi, ci: (0, ci)),   # bias (f32)
                pl.BlockSpec((tile_b, 1), lambda bi, ci: (bi, 0)),   # label (int32)
            ],
            out_specs=pl.BlockSpec((tile_b, 2), lambda bi, ci: (bi, 0)),
            scratch_shapes=[
                pltpu.VMEM((tile_b, E), jnp.bfloat16),  # normalized x (MXU operand)
                pltpu.VMEM((tile_b, 1), jnp.float32),   # running max
                pltpu.VMEM((tile_b, 1), jnp.float32),   # running sum-exp
                pltpu.VMEM((tile_b, 1), jnp.float32),   # target logit
                pltpu.VMEM((tile_b, 1), jnp.int32),     # running argmax
            ],
        ),
        compiler_params=pltpu.CompilerParams(
            dimension_semantics=("parallel", "arbitrary"),
            vmem_limit_bytes=vmem_limit,
        ),
        cost_estimate=cost,
    )(x, w_bf16, bias2, label2)

    # Tiny O(B) final reduction (mean loss, accuracy in percent) outside the kernel.
    loss = jnp.sum(rows[:, 0]) / B
    acc1 = jnp.sum(rows[:, 1]) / B * 100.0
    return loss, acc1


def reference(x, label, weight, bias, mxu_dtype=None):
    """Pure-JAX reference replicating the torch module. With mxu_dtype=bfloat16 it
    mirrors the kernel's bf16 MXU inputs (f32 accumulation) for exact argmax checks."""
    if mxu_dtype is None:
        norm = jnp.sqrt(jnp.sum(x * x, axis=1, keepdims=True))
        x_n = x / jnp.maximum(norm, 1e-12)
        logits = x_n @ weight.T + bias
    else:
        sumsq = jnp.sum(x * x, axis=1, keepdims=True)
        x_n = x * jax.lax.rsqrt(jnp.maximum(sumsq, 1e-24))
        logits = jax.lax.dot_general(
            x_n.astype(mxu_dtype), weight.astype(mxu_dtype),
            dimension_numbers=(((1,), (1,)), ((), ())),
            preferred_element_type=jnp.float32) + bias
    lse = jax.nn.logsumexp(logits, axis=1)
    loss = jnp.mean(lse - logits[jnp.arange(x.shape[0]), label])
    acc = jnp.mean((jnp.argmax(logits, axis=1) == label).astype(jnp.float32)) * 100.0
    return loss, acc


if __name__ == "__main__":
    # Module config (synthetic): embedding_dim=128, num_classes=512,
    # speed_perturb_flag=False -> fc: Linear(128, 512).
    embedding_dim = 128
    num_classes = 512
    batch = 16

    key = jax.random.PRNGKey(0)
    kx, kl, kw, kb = jax.random.split(key, 4)

    x = jax.random.normal(kx, (batch, embedding_dim), dtype=jnp.float32)
    label = jax.random.randint(kl, (batch,), 0, num_classes, dtype=jnp.int32)

    # Deterministic nn.Linear-style init: U(-1/sqrt(E), 1/sqrt(E))
    bound = 1.0 / (embedding_dim ** 0.5)
    weight = jax.random.uniform(kw, (num_classes, embedding_dim),
                                minval=-bound, maxval=bound, dtype=jnp.float32)
    bias = jax.random.uniform(kb, (num_classes,),
                              minval=-bound, maxval=bound, dtype=jnp.float32)

    # (a) explicit small tiles -> grid (2, 2): exercises the online-logsumexp path.
    loss_a, acc_a = softmax_head(x, label, weight, bias, tile_b=8, tile_c=256)
    # (b) auto tile selection (collapses the class grid for this small C).
    loss_b, acc_b = softmax_head(x, label, weight, bias)
    loss_a, acc_a, loss_b, acc_b = jax.block_until_ready((loss_a, acc_a, loss_b, acc_b))

    # bf16-MXU reference (same matmul precision as the kernel) for tight checks,
    # plus the torch-faithful f32 reference with a loosened tolerance (bf16 MXU inputs).
    ref_loss_bf, ref_acc_bf = reference(x, label, weight, bias, mxu_dtype=jnp.bfloat16)
    ref_loss_f32, ref_acc_f32 = reference(x, label, weight, bias)

    for name, (ls, ac) in (("tiled", (loss_a, acc_a)), ("auto", (loss_b, acc_b))):
        assert jnp.allclose(ls, ref_loss_bf, atol=1e-4, rtol=1e-4), (name, ls, ref_loss_bf)
        assert jnp.allclose(ac, ref_acc_bf, atol=1e-3), (name, ac, ref_acc_bf)
        assert jnp.allclose(ls, ref_loss_f32, atol=2e-2, rtol=2e-2), (name, ls, ref_loss_f32)

    print("KERNEL_OK")
</pallas_src>

<mosaic_0001>
module attributes {stable_mosaic.version = 11 : i64} {
  func.func @softmax_loss_kernel(%arg0: i32, %arg1: i32, %arg2: memref<8x128xf32, #tpu.memory_space<vmem>>, %arg3: memref<256x128xbf16, #tpu.memory_space<vmem>>, %arg4: memref<1x256xf32, #tpu.memory_space<vmem>>, %arg5: memref<8x1xi32, #tpu.memory_space<vmem>>, %arg6: memref<8x2xf32, #tpu.memory_space<vmem>>, %arg7: memref<8x128xbf16, #tpu.memory_space<vmem>>, %arg8: memref<8x1xf32, #tpu.memory_space<vmem>>, %arg9: memref<8x1xf32, #tpu.memory_space<vmem>>, %arg10: memref<8x1xf32, #tpu.memory_space<vmem>>, %arg11: memref<8x1xi32, #tpu.memory_space<vmem>>) attributes {dimension_semantics = [#tpu.dimension_semantics<parallel>, #tpu.dimension_semantics<arbitrary>], iteration_bounds = array<i64: 2, 2>, scalar_prefetch = 0 : i64, scratch_operands = 5 : i64, tpu.core_type = #tpu.core_type<tc>, window_params = [{transform_indices = @transform_0, window_bounds = array<i64: 8, 128>}, {transform_indices = @transform_1, window_bounds = array<i64: 256, 128>}, {transform_indices = @transform_2, window_bounds = array<i64: 1, 256>}, {transform_indices = @transform_3, window_bounds = array<i64: 8, 1>}, {transform_indices = @transform_4, window_bounds = array<i64: 8, 2>}]} {
    %c0_i32 = arith.constant 0 : i32
    %0 = arith.cmpi eq, %arg1, %c0_i32 : i32
    %1 = arith.extui %0 : i1 to i32
    %c0_i32_0 = arith.constant 0 : i32
    %2 = arith.cmpi ne, %1, %c0_i32_0 : i32
    scf.if %2 {
      %c0_31 = arith.constant 0 : index
      %c0_32 = arith.constant 0 : index
      %55 = vector.load %arg2[%c0_31, %c0_32] : memref<8x128xf32, #tpu.memory_space<vmem>>, vector<8x128xf32>
      %56 = arith.mulf %55, %55 : vector<8x128xf32>
      %cst_33 = arith.constant dense<0.000000e+00> : vector<8xf32>
      %57 = vector.multi_reduction <add>, %56, %cst_33 [1] : vector<8x128xf32> to vector<8xf32>
      %58 = vector.shape_cast %57 : vector<8xf32> to vector<8x1xf32>
      %cst_34 = arith.constant 1.000000e-24 : f32
      %59 = vector.broadcast %cst_34 : f32 to vector<8x1xf32>
      %60 = arith.maximumf %58, %59 : vector<8x1xf32>
      %61 = math.rsqrt %60 : vector<8x1xf32>
      %62 = vector.broadcast %61 : vector<8x1xf32> to vector<8x128xf32>
      %63 = arith.mulf %55, %62 : vector<8x128xf32>
      %64 = arith.truncf %63 : vector<8x128xf32> to vector<8x128xbf16>
      %c0_35 = arith.constant 0 : index
      %c0_36 = arith.constant 0 : index
      %65 = vector.load %arg7[%c0_35, %c0_36] : memref<8x128xbf16, #tpu.memory_space<vmem>>, vector<8x128xbf16>
      tpu.vector_store %arg7[%c0_35, %c0_36], %64 {strides = array<i32>} : memref<8x128xbf16, #tpu.memory_space<vmem>>, vector<8x128xbf16>,
      %cst_37 = arith.constant 0xFF800000 : f32
      %66 = vector.broadcast %cst_37 : f32 to vector<8x1xf32>
      %c0_38 = arith.constant 0 : index
      %c0_39 = arith.constant 0 : index
      %67 = vector.load %arg8[%c0_38, %c0_39] : memref<8x1xf32, #tpu.memory_space<vmem>>, vector<8x1xf32>
      tpu.vector_store %arg8[%c0_38, %c0_39], %66 {strides = array<i32>} : memref<8x1xf32, #tpu.memory_space<vmem>>, vector<8x1xf32>,
      %cst_40 = arith.constant 0.000000e+00 : f32
      %68 = vector.broadcast %cst_40 : f32 to vector<8x1xf32>
      %c0_41 = arith.constant 0 : index
      %c0_42 = arith.constant 0 : index
      %69 = vector.load %arg9[%c0_41, %c0_42] : memref<8x1xf32, #tpu.memory_space<vmem>>, vector<8x1xf32>
      tpu.vector_store %arg9[%c0_41, %c0_42], %68 {strides = array<i32>} : memref<8x1xf32, #tpu.memory_space<vmem>>, vector<8x1xf32>,
      %cst_43 = arith.constant 0.000000e+00 : f32
      %70 = vector.broadcast %cst_43 : f32 to vector<8x1xf32>
      %c0_44 = arith.constant 0 : index
      %c0_45 = arith.constant 0 : index
      %71 = vector.load %arg10[%c0_44, %c0_45] : memref<8x1xf32, #tpu.memory_space<vmem>>, vector<8x1xf32>
      tpu.vector_store %arg10[%c0_44, %c0_45], %70 {strides = array<i32>} : memref<8x1xf32, #tpu.memory_space<vmem>>, vector<8x1xf32>,
      %c0_i32_46 = arith.constant 0 : i32
      %72 = vector.broadcast %c0_i32_46 : i32 to vector<8x1xi32>
      %c0_47 = arith.constant 0 : index
      %c0_48 = arith.constant 0 : index
      %73 = vector.load %arg11[%c0_47, %c0_48] : memref<8x1xi32, #tpu.memory_space<vmem>>, vector<8x1xi32>
      tpu.vector_store %arg11[%c0_47, %c0_48], %72 {strides = array<i32>} : memref<8x1xi32, #tpu.memory_space<vmem>>, vector<8x1xi32>,
    } else {
    }
    %c0 = arith.constant 0 : index
    %c0_1 = arith.constant 0 : index
    %3 = vector.load %arg7[%c0, %c0_1] : memref<8x128xbf16, #tpu.memory_space<vmem>>, vector<8x128xbf16>
    %c0_2 = arith.constant 0 : index
    %c0_3 = arith.constant 0 : index
    %4 = vector.load %arg3[%c0_2, %c0_3] : memref<256x128xbf16, #tpu.memory_space<vmem>>, vector<256x128xbf16>
    %cst = arith.constant dense<0.000000e+00> : vector<8x256xf32>
    %5 = tpu.matmul %3, %4, %cst {dimension_numbers = #tpu.dot_dimension_numbers<[1], [1], [0], [0], [0, 0, 1, 0], [], []>} : vector<8x128xbf16>, vector<256x128xbf16>, vector<8x256xf32> -> vector<8x256xf32>
    %c0_4 = arith.constant 0 : index
    %c0_5 = arith.constant 0 : index
    %6 = vector.load %arg4[%c0_4, %c0_5] : memref<1x256xf32, #tpu.memory_space<vmem>>, vector<1x256xf32>
    %7 = vector.broadcast %6 : vector<1x256xf32> to vector<8x256xf32>
    %8 = arith.addf %5, %7 : vector<8x256xf32>
    %9 = tpu.iota {dimensions = array<i32: 1>} : vector<8x256xi32>
    %c0_6 = arith.constant 0 : index
    %c0_7 = arith.constant 0 : index
    %10 = vector.load %arg5[%c0_6, %c0_7] : memref<8x1xi32, #tpu.memory_space<vmem>>, vector<8x1xi32>
    %c256_i32 = arith.constant 256 : i32
    %11 = arith.muli %arg1, %c256_i32 : i32
    %12 = vector.broadcast %11 : i32 to vector<8x1xi32>
    %13 = arith.subi %10, %12 : vector<8x1xi32>
    %cst_8 = arith.constant dense<0xFF800000> : vector<8xf32>
    %14 = vector.multi_reduction <maximumf>, %8, %cst_8 [1] : vector<8x256xf32> to vector<8xf32>
    %15 = vector.shape_cast %14 : vector<8xf32> to vector<8x1xf32>
    %c0_9 = arith.constant 0 : index
    %c0_10 = arith.constant 0 : index
    %16 = vector.load %arg8[%c0_9, %c0_10] : memref<8x1xf32, #tpu.memory_space<vmem>>, vector<8x1xf32>
    %17 = arith.maximumf %16, %15 : vector<8x1xf32>
    %c0_11 = arith.constant 0 : index
    %c0_12 = arith.constant 0 : index
    %18 = vector.load %arg9[%c0_11, %c0_12] : memref<8x1xf32, #tpu.memory_space<vmem>>, vector<8x1xf32>
    %19 = arith.subf %16, %17 : vector<8x1xf32>
    %20 = math.exp %19 : vector<8x1xf32>
    %21 = arith.mulf %18, %20 : vector<8x1xf32>
    %22 = vector.broadcast %17 : vector<8x1xf32> to vector<8x256xf32>
    %23 = arith.subf %8, %22 : vector<8x256xf32>
    %24 = math.exp %23 : vector<8x256xf32>
    %cst_13 = arith.constant dense<0.000000e+00> : vector<8xf32>
    %25 = vector.multi_reduction <add>, %24, %cst_13 [1] : vector<8x256xf32> to vector<8xf32>
    %26 = vector.shape_cast %25 : vector<8xf32> to vector<8x1xf32>
    %27 = arith.addf %21, %26 : vector<8x1xf32>
    %c0_14 = arith.constant 0 : index
    %c0_15 = arith.constant 0 : index
    %28 = vector.load %arg9[%c0_14, %c0_15] : memref<8x1xf32, #tpu.memory_space<vmem>>, vector<8x1xf32>
    tpu.vector_store %arg9[%c0_14, %c0_15], %27 {strides = array<i32>} : memref<8x1xf32, #tpu.memory_space<vmem>>, vector<8x1xf32>,
    %c0_16 = arith.constant 0 : index
    %c0_17 = arith.constant 0 : index
    %29 = vector.load %arg10[%c0_16, %c0_17] : memref<8x1xf32, #tpu.memory_space<vmem>>, vector<8x1xf32>
    %30 = vector.broadcast %13 : vector<8x1xi32> to vector<8x256xi32>
    %31 = arith.cmpi eq, %9, %30 : vector<8x256xi32>
    %cst_18 = arith.constant 0.000000e+00 : f32
    %32 = vector.broadcast %cst_18 : f32 to vector<8x256xf32>
    %33 = arith.select %31, %8, %32 : vector<8x256xi1>, vector<8x256xf32>
    %cst_19 = arith.constant dense<0.000000e+00> : vector<8xf32>
    %34 = vector.multi_reduction <add>, %33, %cst_19 [1] : vector<8x256xf32> to vector<8xf32>
    %35 = vector.shape_cast %34 : vector<8xf32> to vector<8x1xf32>
    %36 = arith.addf %29, %35 : vector<8x1xf32>
    %c0_20 = arith.constant 0 : index
    %c0_21 = arith.constant 0 : index
    %37 = vector.load %arg10[%c0_20, %c0_21] : memref<8x1xf32, #tpu.memory_space<vmem>>, vector<8x1xf32>
    tpu.vector_store %arg10[%c0_20, %c0_21], %36 {strides = array<i32>} : memref<8x1xf32, #tpu.memory_space<vmem>>, vector<8x1xf32>,
    %38 = vector.broadcast %15 : vector<8x1xf32> to vector<8x256xf32>
    %39 = arith.cmpf oeq, %8, %38 : vector<8x256xf32>
    %c2147483647_i32 = arith.constant 2147483647 : i32
    %40 = vector.broadcast %c2147483647_i32 : i32 to vector<8x256xi32>
    %41 = arith.select %39, %9, %40 : vector<8x256xi1>, vector<8x256xi32>
    %cst_22 = arith.constant dense<2147483647> : vector<8xi32>
    %42 = vector.multi_reduction <minsi>, %41, %cst_22 [1] : vector<8x256xi32> to vector<8xi32>
    %43 = vector.shape_cast %42 : vector<8xi32> to vector<8x1xi32>
    %c256_i32_23 = arith.constant 256 : i32
    %44 = arith.muli %arg1, %c256_i32_23 : i32
    %45 = vector.broadcast %44 : i32 to vector<8x1xi32>
    %46 = arith.addi %43, %45 : vector<8x1xi32>
    %47 = arith.cmpf ogt, %15, %16 : vector<8x1xf32>
    %c0_24 = arith.constant 0 : index
    %c0_25 = arith.constant 0 : index
    %48 = vector.load %arg11[%c0_24, %c0_25] : memref<8x1xi32, #tpu.memory_space<vmem>>, vector<8x1xi32>
    %49 = arith.select %47, %46, %48 : vector<8x1xi1>, vector<8x1xi32>
    %c0_26 = arith.constant 0 : index
    %c0_27 = arith.constant 0 : index
    %50 = vector.load %arg11[%c0_26, %c0_27] : memref<8x1xi32, #tpu.memory_space<vmem>>, vector<8x1xi32>
    tpu.vector_store %arg11[%c0_26, %c0_27], %49 {strides = array<i32>} : memref<8x1xi32, #tpu.memory_space<vmem>>, vector<8x1xi32>,
    %c0_28 = arith.constant 0 : index
    %c0_29 = arith.constant 0 : index
    %51 = vector.load %arg8[%c0_28, %c0_29] : memref<8x1xf32, #tpu.memory_space<vmem>>, vector<8x1xf32>
    tpu.vector_store %arg8[%c0_28, %c0_29], %17 {strides = array<i32>} : memref<8x1xf32, #tpu.memory_space<vmem>>, vector<8x1xf32>,
    %c1_i32 = arith.constant 1 : i32
    %52 = arith.cmpi eq, %arg1, %c1_i32 : i32
    %53 = arith.extui %52 : i1 to i32
    %c0_i32_30 = arith.constant 0 : i32
    %54 = arith.cmpi ne, %53, %c0_i32_30 : i32
    scf.if %54 {
      %c0_31 = arith.constant 0 : index
      %c0_32 = arith.constant 0 : index
      %55 = vector.load %arg8[%c0_31, %c0_32] : memref<8x1xf32, #tpu.memory_space<vmem>>, vector<8x1xf32>
      %c0_33 = arith.constant 0 : index
      %c0_34 = arith.constant 0 : index
      %56 = vector.load %arg9[%c0_33, %c0_34] : memref<8x1xf32, #tpu.memory_space<vmem>>, vector<8x1xf32>
      %57 = math.log %56 : vector<8x1xf32>
      %58 = arith.addf %55, %57 : vector<8x1xf32>
      %c0_35 = arith.constant 0 : index
      %c0_36 = arith.constant 0 : index
      %59 = vector.load %arg10[%c0_35, %c0_36] : memref<8x1xf32, #tpu.memory_space<vmem>>, vector<8x1xf32>
      %60 = arith.subf %58, %59 : vector<8x1xf32>
      %c0_37 = arith.constant 0 : index
      %c0_38 = arith.constant 0 : index
      %61 = vector.load %arg11[%c0_37, %c0_38] : memref<8x1xi32, #tpu.memory_space<vmem>>, vector<8x1xi32>
      %c0_39 = arith.constant 0 : index
      %c0_40 = arith.constant 0 : index
      %62 = vector.load %arg5[%c0_39, %c0_40] : memref<8x1xi32, #tpu.memory_space<vmem>>, vector<8x1xi32>
      %63 = arith.cmpi eq, %61, %62 : vector<8x1xi32>
      %64 = arith.extui %63 : vector<8x1xi1> to vector<8x1xi32>
      %65 = arith.sitofp %64 : vector<8x1xi32> to vector<8x1xf32>
      %66 = tpu.concatenate %60, %65 in 1 : vector<8x1xf32>, vector<8x1xf32> -> vector<8x2xf32>
      %c0_41 = arith.constant 0 : index
      %c0_42 = arith.constant 0 : index
      %67 = vector.load %arg6[%c0_41, %c0_42] : memref<8x2xf32, #tpu.memory_space<vmem>>, vector<8x2xf32>
      tpu.vector_store %arg6[%c0_41, %c0_42], %66 {strides = array<i32>} : memref<8x2xf32, #tpu.memory_space<vmem>>, vector<8x2xf32>,
    } else {
    }
    return
  }
  func.func @transform_0(%arg0: i32, %arg1: i32) -> (i32, i32) {
    %c0_i32 = arith.constant 0 : i32
    %c0_i32_0 = arith.constant 0 : i32
    return %arg0, %c0_i32 : i32, i32
  }
  func.func @transform_1(%arg0: i32, %arg1: i32) -> (i32, i32) {
    %c0_i32 = arith.constant 0 : i32
    %c0_i32_0 = arith.constant 0 : i32
    return %arg1, %c0_i32 : i32, i32
  }
  func.func @transform_2(%arg0: i32, %arg1: i32) -> (i32, i32) {
    %c0_i32 = arith.constant 0 : i32
    %c0_i32_0 = arith.constant 0 : i32
    return %c0_i32, %arg1 : i32, i32
  }
  func.func @transform_3(%arg0: i32, %arg1: i32) -> (i32, i32) {
    %c0_i32 = arith.constant 0 : i32
    %c0_i32_0 = arith.constant 0 : i32
    return %arg0, %c0_i32 : i32, i32
  }
  func.func @transform_4(%arg0: i32, %arg1: i32) -> (i32, i32) {
    %c0_i32 = arith.constant 0 : i32
    %c0_i32_0 = arith.constant 0 : i32
    return %arg0, %c0_i32 : i32, i32
  }
}

</mosaic_0001>

<llo_original>
// kernel: tpu_custom_call.1
$region0: #{tpu_custom_call.1}
  #allocation0 [shape = 'u32[]', space=smem, size = 0x4, offset = 0x4, fixed_abs, tag = 'smem constant byte address 0x4 - core index']
  #allocation1 [shape = 'u32[144,128]{1,0:T(1,128)}', space=vmem, size = 0x12000, scoped, tag = 'internal scratch']
  #allocation2 [shape = 'bf16[8,128]{1,0:T(8,128)(2,1)}', space=vmem, size = 0x800, scoped, tag = 'scratch operand']
  #allocation3 [shape = 'f32[8,1]{1,0:T(8,128)}', space=vmem, size = 0x1000, scoped, tag = 'scratch operand']
  #allocation4 [shape = 'f32[8,1]{1,0:T(8,128)}', space=vmem, size = 0x1000, scoped, tag = 'scratch operand']
  #allocation5 [shape = 'f32[8,1]{1,0:T(8,128)}', space=vmem, size = 0x1000, scoped, tag = 'scratch operand']
  #allocation6 [shape = 's32[8,1]{1,0:T(8,128)}', space=vmem, size = 0x1000, scoped, tag = 'scratch operand']
  %s0 = inlined_call_operand.vmem [shape: f32[16,128], index: 0, kind: input, shape index: {}]
  %s1 = inlined_call_operand.hbm [shape: bf16[512,128], index: 1, kind: input, shape index: {}]
  %s2 = inlined_call_operand.vmem [shape: f32[1,512], index: 2, kind: input, shape index: {}]
  %s3 = inlined_call_operand.vmem [shape: s32[16,1], index: 3, kind: input, shape index: {}]
  %s4 = inlined_call_operand.vmem [shape: f32[16,2], index: 4, kind: output, shape index: {}]
  %s5 = sld [smem:[#allocation0]]
  $region61: #{tpu_custom_call.1} parent=0
    _
  %s7 = ssub.s32 1, %s5
  %s8 = scalar_select 0, %s7, %s5
  $region1: #{tpu_custom_call.1} parent=0
    #allocation7 [shape = 'u8[131072]{0}', space=vmem, size = 0x20000, scoped, tag = 'input window, operand 1']
    #allocation8 [shape = 's32[2]{0}', space=sflag, size = 0x8, scoped, tag = 'scoped memory for tpu_custom_call.1']
    %9 = vsyncpa [#allocation8], 0
    %s10 = scalar_lea.sflag [#allocation8], 1
    %11 = vsyncpa %s10, 0
    loop: start=0, step=1, limit=6
    $region2: #{tpu_custom_call.1} parent=1 // loop_pre_header
      _
    $region3: #{tpu_custom_call.1} parent=1 // loop_header
      %s13 = sphi 0, %s17
      %p14 = scmp.ge.s32.totalorder %s13, 6
      %s20 = sphi 0, %s32
      %s21 = sphi 0, %s28
      %s22 = sphi 0, %s20
      %s23 = sphi 0, %s21
      %s24 = sphi 0, %s22
      %s25 = sphi 0, %s23
      %s35 = sphi 0, %s37
      %s38 = sphi 0, %s35
      %s39 = sphi 0, %s38
      %s55 = sphi 0, %s39
      %s61 = sphi 0, %s63
      %s64 = sphi 0, %s61
      %s65 = sphi 0, %s64
      %s81 = sphi 0, %s65
      %s87 = sphi 0, %s89
      %s90 = sphi 0, %s87
      %s91 = sphi 0, %s90
      %s107 = sphi 0, %s91
      %s113 = sphi 0, %s115
      %s116 = sphi 0, %s113
      %s117 = sphi 0, %s116
      %s133 = sphi 0, %s117
      %s139 = sphi 0, %s141
      %s142 = sphi 0, %s139
      %s143 = sphi 0, %s142
      %s159 = sphi 0, %s143
    $region4: #{tpu_custom_call.1} parent=1 // loop_header_branch
      %16 = sbr.rel (%p14) target = $region8
    $region5: #{tpu_custom_call.1} parent=1 // loop_body
      %s18 = ssub.s32 %s13, 1
      %s19 = ssub.s32 %s13, 2
      %s26 = sadd.s32 1, %s21
      %p27 = scmp.ge.s32.totalorder %s26, 2
      %s28 = scalar_select %p27, 0, %s26
      %s29 = sadd.s32 1, %s20
      %s30 = scalar_select %p27, %s29, %s20
      %p31 = scmp.ge.s32.totalorder %s30, 2
      %s32 = scalar_select %p31, 0, %s30
      %s33 = ssub.s32 %s20, %s32
      %p34 = scmp.eq.s32.totalorder %s33, 0
      %s36 = sadd.s32 %s35, 1
      %s37 = scalar_select %p34, %s35, %s36
      %p40 = pneg %p34
      %p41 = scmp.eq.s32.totalorder %s13, 3
      %p42 = por %p40, %p41
      %p43 = scmp.ne.s32.totalorder %s35, %s38
      %p44 = scmp.eq.s32.totalorder %s13, 0
      %p45 = por %p43, %p44
      %p46 = scmp.ne.s32.totalorder %s35, %s38
      %p47 = scmp.eq.s32.totalorder %s18, 3
      %p48 = por %p46, %p47
      %p49 = scmp.ne.s32.totalorder %s38, %s39
      %p50 = scmp.eq.s32.totalorder %s18, 0
      %p51 = por %p49, %p50
      %p52 = scmp.ne.s32.totalorder %s38, %s39
      %p53 = scmp.eq.s32.totalorder %s19, 3
      %p54 = por %p52, %p53
      %p56 = scmp.ne.s32.totalorder %s39, %s55
      %p57 = scmp.eq.s32.totalorder %s19, 0
      %p58 = por %p56, %p57
      %s59 = ssub.s32 %s21, %s28
      %p60 = scmp.eq.s32.totalorder %s59, 0
      %s62 = sadd.s32 %s61, 1
      %s63 = scalar_select %p60, %s61, %s62
      %p66 = pneg %p60
      %p67 = scmp.eq.s32.totalorder %s13, 3
      %p68 = por %p66, %p67
      %p69 = scmp.ne.s32.totalorder %s61, %s64
      %p70 = scmp.eq.s32.totalorder %s13, 0
      %p71 = por %p69, %p70
      %p72 = scmp.ne.s32.totalorder %s61, %s64
      %p73 = scmp.eq.s32.totalorder %s18, 3
      %p74 = por %p72, %p73
      %p75 = scmp.ne.s32.totalorder %s64, %s65
      %p76 = scmp.eq.s32.totalorder %s18, 0
      %p77 = por %p75, %p76
      %p78 = scmp.ne.s32.totalorder %s64, %s65
      %p79 = scmp.eq.s32.totalorder %s19, 3
      %p80 = por %p78, %p79
      %p82 = scmp.ne.s32.totalorder %s65, %s81
      %p83 = scmp.eq.s32.totalorder %s19, 0
      %p84 = por %p82, %p83
      %s85 = ssub.s32 %s21, %s28
      %p86 = scmp.eq.s32.totalorder %s85, 0
      %s88 = sadd.s32 %s87, 1
      %s89 = scalar_select %p86, %s87, %s88
      %p92 = pneg %p86
      %p93 = scmp.eq.s32.totalorder %s13, 3
      %p94 = por %p92, %p93
      %p95 = scmp.ne.s32.totalorder %s87, %s90
      %p96 = scmp.eq.s32.totalorder %s13, 0
      %p97 = por %p95, %p96
      %p98 = scmp.ne.s32.totalorder %s87, %s90
      %p99 = scmp.eq.s32.totalorder %s18, 3
      %p100 = por %p98, %p99
      %p101 = scmp.ne.s32.totalorder %s90, %s91
      %p102 = scmp.eq.s32.totalorder %s18, 0
      %p103 = por %p101, %p102
      %p104 = scmp.ne.s32.totalorder %s90, %s91
      %p105 = scmp.eq.s32.totalorder %s19, 3
      %p106 = por %p104, %p105
      %p108 = scmp.ne.s32.totalorder %s91, %s107
      %p109 = scmp.eq.s32.totalorder %s19, 0
      %p110 = por %p108, %p109
      %s111 = ssub.s32 %s20, %s32
      %p112 = scmp.eq.s32.totalorder %s111, 0
      %s114 = sadd.s32 %s113, 1
      %s115 = scalar_select %p112, %s113, %s114
      %p118 = pneg %p112
      %p119 = scmp.eq.s32.totalorder %s13, 3
      %p120 = por %p118, %p119
      %p121 = scmp.ne.s32.totalorder %s113, %s116
      %p122 = scmp.eq.s32.totalorder %s13, 0
      %p123 = por %p121, %p122
      %p124 = scmp.ne.s32.totalorder %s113, %s116
      %p125 = scmp.eq.s32.totalorder %s18, 3
      %p126 = por %p124, %p125
      %p127 = scmp.ne.s32.totalorder %s116, %s117
      %p128 = scmp.eq.s32.totalorder %s18, 0
      %p129 = por %p127, %p128
      %p130 = scmp.ne.s32.totalorder %s116, %s117
      %p131 = scmp.eq.s32.totalorder %s19, 3
      %p132 = por %p130, %p131
      %p134 = scmp.ne.s32.totalorder %s117, %s133
      %p135 = scmp.eq.s32.totalorder %s19, 0
      %p136 = por %p134, %p135
      %s137 = ssub.s32 %s20, %s32
      %p138 = scmp.eq.s32.totalorder %s137, 0
      %s140 = sadd.s32 %s139, 1
      %s141 = scalar_select %p138, %s139, %s140
      %p144 = pneg %p138
      %p145 = scmp.eq.s32.totalorder %s13, 3
      %p146 = por %p144, %p145
      %p147 = scmp.ne.s32.totalorder %s139, %s142
      %p148 = scmp.eq.s32.totalorder %s13, 0
      %p149 = por %p147, %p148
      %p150 = scmp.ne.s32.totalorder %s139, %s142
      %p151 = scmp.eq.s32.totalorder %s18, 3
      %p152 = por %p150, %p151
      %p153 = scmp.ne.s32.totalorder %s142, %s143
      %p154 = scmp.eq.s32.totalorder %s18, 0
      %p155 = por %p153, %p154
      %p156 = scmp.ne.s32.totalorder %s142, %s143
      %p157 = scmp.eq.s32.totalorder %s19, 3
      %p158 = por %p156, %p157
      %p160 = scmp.ne.s32.totalorder %s143, %s159
      %p161 = scmp.eq.s32.totalorder %s19, 0
      %p162 = por %p160, %p161
      %p163 = scmp.le.s32.totalorder 1, %s13
      %p164 = scmp.lt.s32.totalorder %s13, 5
      %p165 = pnand %p163, %p164
      %p166 = pneg %p165
      // Predicated region
      $region9: #{tpu_custom_call.1} parent=5 // pred_check
        _
      $region10: #{tpu_custom_call.1} parent=5 // pred_check_branch
        %168 = sbr.rel (%p165) target = $region12
      $region11: #{tpu_custom_call.1} parent=5 // pred_region
        %s169 = ssub.s32 %s13, 1
      $region12: #{tpu_custom_call.1} parent=5 // pred_fallthru
        _
      %p170 = scmp.lt.s32.totalorder %s13, 4
      // Predicated region
      $region13: #{tpu_custom_call.1} parent=5 // pred_check
        %p171 = pneg %p170
      $region14: #{tpu_custom_call.1} parent=5 // pred_check_branch
        %173 = sbr.rel (%p171) target = $region16
      $region15: #{tpu_custom_call.1} parent=5 // pred_region
        // Predicated region
        $region17: #{tpu_custom_call.1} parent=15 // pred_check
          %p174 = pneg %p45
        $region18: #{tpu_custom_call.1} parent=15 // pred_check_branch
          %176 = sbr.rel (%p174) target = $region20
        $region19: #{tpu_custom_call.1} parent=15 // pred_region
          %p177 = scmp.lt.s32.totalorder %s20, 1
          %s178 = scalar_select %p177, %s20, 1
          %s179 = smul.addr %s178, 8
          %s180 = scalar_lea.vmem %s0, %s179
        $region20: #{tpu_custom_call.1} parent=15 // pred_fallthru
          _
        // Predicated region
        $region21: #{tpu_custom_call.1} parent=15 // pred_check
          %p181 = pneg %p71
        $region22: #{tpu_custom_call.1} parent=15 // pred_check_branch
          %183 = sbr.rel (%p181) target = $region24
        $region23: #{tpu_custom_call.1} parent=15 // pred_region
          %s184 = sand.u32 %s61, 1
          %s185 = scalar_lea.sflag [#allocation8], %s184
          %s186 = sand.u32 %s61, 1
          %s187 = smul.addr %s186, 128
          %s188 = scalar_lea.vmem [#allocation7], %s187
          %s189 = smul.u32 32, %s21
          %s191 = ssub.s32 2048, 2048
          %192 = vsyncadd %s185, %s191
          %s193 = smul.addr %s189, 64
          %s194 = scalar_lea.hbm %s1, %s193
          %s195 = sshll.u32 %s188, 4
          %s196 = int_to_ptr.vmem [resolvable:$true] %s195
          %201 = dma.hbm_to_vmem [thread:$0]  %s194, 2048, %s196, %s185, 64, 64, 4
        $region24: #{tpu_custom_call.1} parent=15 // pred_fallthru
          _
        // Predicated region
        $region25: #{tpu_custom_call.1} parent=15 // pred_check
          %p202 = pneg %p97
        $region26: #{tpu_custom_call.1} parent=15 // pred_check_branch
          %204 = sbr.rel (%p202) target = $region28
        $region27: #{tpu_custom_call.1} parent=15 // pred_region
          %s205 = smul.u32 2, %s21
          %p206 = scmp.lt.s32.totalorder %s205, 3
          %s207 = scalar_select %p206, %s205, 3
          %s208 = scalar_lea.vmem %s2, %s207
          %s209 = smul.u32 2, %s21
        $region28: #{tpu_custom_call.1} parent=15 // pred_fallthru
          _
        // Predicated region
        $region29: #{tpu_custom_call.1} parent=15 // pred_check
          %p210 = pneg %p123
        $region30: #{tpu_custom_call.1} parent=15 // pred_check_branch
          %212 = sbr.rel (%p210) target = $region32
        $region31: #{tpu_custom_call.1} parent=15 // pred_region
          %p213 = scmp.lt.s32.totalorder %s20, 1
          %s214 = scalar_select %p213, %s20, 1
          %s215 = smul.addr %s214, 8
          %s216 = scalar_lea.vmem %s3, %s215
        $region32: #{tpu_custom_call.1} parent=15 // pred_fallthru
          _
      $region16: #{tpu_custom_call.1} parent=5 // pred_fallthru
        _
      %p217 = scmp.le.s32.totalorder 1, %s13
      %p218 = scmp.lt.s32.totalorder %s13, 5
      %p219 = pnand %p217, %p218
      %p220 = pneg %p219
      // Predicated region
      $region33: #{tpu_custom_call.1} parent=5 // pred_check
        _
      $region34: #{tpu_custom_call.1} parent=5 // pred_check_branch
        %222 = sbr.rel (%p219) target = $region36
      $region35: #{tpu_custom_call.1} parent=5 // pred_region
        %s223 = ssub.s32 %s13, 1
        %s224 = sand.u32 %s64, 1
        %s225 = scalar_lea.sflag [#allocation8], %s224
        %s226 = sand.u32 %s64, 1
        %s227 = smul.addr %s226, 128
        %s228 = scalar_lea.vmem [#allocation7], %s227
        // Predicated region
        $region37: #{tpu_custom_call.1} parent=35 // pred_check
          %p229 = pneg %p77
        $region38: #{tpu_custom_call.1} parent=35 // pred_check_branch
          %231 = sbr.rel (%p229) target = $region40
        $region39: #{tpu_custom_call.1} parent=35 // pred_region
          %232 = dma.done %s225, 2048
        $region40: #{tpu_custom_call.1} parent=35 // pred_fallthru
          _
        %p233 = scmp.lt.s32.totalorder %s22, 1
        %s234 = scalar_select %p233, %s22, 1
        %s235 = smul.addr %s234, 8
        %s236 = scalar_lea.vmem %s0, %s235
        %p237 = pneg %p51
        %p238 = pneg %p48
        %s239 = sand.u32 %s64, 1
        %s240 = scalar_lea.sflag [#allocation8], %s239
        %s241 = sand.u32 %s64, 1
        %s242 = smul.addr %s241, 128
        %s243 = scalar_lea.vmem [#allocation7], %s242
        %p244 = pneg %p77
        %p245 = pneg %p74
        %s246 = smul.u32 2, %s23
        %p247 = scmp.lt.s32.totalorder %s246, 3
        %s248 = scalar_select %p247, %s246, 3
        %s249 = scalar_lea.vmem %s2, %s248
        %p250 = pneg %p103
        %p251 = pneg %p100
        %p252 = scmp.lt.s32.totalorder %s22, 1
        %s253 = scalar_select %p252, %s22, 1
        %s254 = smul.addr %s253, 8
        %s255 = scalar_lea.vmem %s3, %s254
        %p256 = pneg %p129
        %p257 = pneg %p126
        %p258 = pneg %p155
        %p259 = pneg %p152
        %p260 = scmp.lt.s32.totalorder %s22, 1
        %s261 = scalar_select %p260, %s22, 1
        %s262 = smul.addr %s261, 8
        %s263 = scalar_lea.vmem %s4, %s262
        %p264 = scmp.lt.s32.totalorder %s22, 1
        %s265 = scalar_select %p264, %s22, 1
        %s266 = smul.addr %s265, 8
        %s267 = scalar_lea.vmem %s0, %s266
        %s268 = smul.u32 32, %s23
        %s269 = smul.u32 2, %s23
        %p270 = scmp.lt.s32.totalorder %s269, 3
        %s271 = scalar_select %p270, %s269, 3
        %s272 = scalar_lea.vmem %s2, %s271
        %s273 = smul.u32 2, %s23
        %p274 = scmp.lt.s32.totalorder %s22, 1
        %s275 = scalar_select %p274, %s22, 1
        %s276 = smul.addr %s275, 8
        %s277 = scalar_lea.vmem %s3, %s276
        %p278 = scmp.lt.s32.totalorder %s22, 1
        %s279 = scalar_select %p278, %s22, 1
        %s280 = smul.addr %s279, 8
        %s281 = scalar_lea.vmem %s4, %s280
        %p283 = scmp.eq.s32.totalorder %s23, 0
        // Predicated region
        $region41: #{tpu_custom_call.1} parent=35 // pred_check
          %p284 = pneg %p283
        $region42: #{tpu_custom_call.1} parent=35 // pred_check_branch
          %286 = sbr.rel (%p284) target = $region44
        $region43: #{tpu_custom_call.1} parent=35 // pred_region
          %v287 = vld [vmem:[%s267] sm:$0xff]
          %v288 = vmul.f32 %v287, %v287
          %289 = vadd.xlane.f32.xlu0 %v288
          %v290 = vpop.xlane.xlu0 %289
          %v291 = vmax.f32 %v290, 1e-24
          %v292 = vrsqrt.pop %v291
          %v293 = vmul.f32 %v287, %v292
          %v294 = vpack.c.bf16 %v293, %v293
          %295 = vst [vmem:[#allocation2] sm:$0xf] %v294
          %vm296 = vcmask 7168
          %297 = vst.msk [vmem:[#allocation3] sm:$0xff] %vm296, -inf
          %298 = vst.msk [vmem:[#allocation4] sm:$0xff] %vm296, 0.0
          %299 = vst.msk [vmem:[#allocation5] sm:$0xff] %vm296, 0.0
          %300 = vst.msk [vmem:[#allocation6] sm:$0xff] %vm296, 0
        $region44: #{tpu_custom_call.1} parent=35 // pred_fallthru
          _
        %v301 = vld [vmem:[#allocation2] sm:$0xf]
        %v302 = vld [vmem:[%s228] sm:$0xf]
        %v303 = vld [vmem:[%s228 + $0x4] sm:$0xf]
        %v304 = vld [vmem:[%s228 + $0x8] sm:$0xf]
        %v305 = vld [vmem:[%s228 + $0xc] sm:$0xf]
        %v306 = vld [vmem:[%s228 + $0x10] sm:$0xf]
        %v307 = vld [vmem:[%s228 + $0x14] sm:$0xf]
        %v308 = vld [vmem:[%s228 + $0x18] sm:$0xf]
        %v309 = vld [vmem:[%s228 + $0x1c] sm:$0xf]
        %v310 = vld [vmem:[%s228 + $0x20] sm:$0xf]
        %v311 = vld [vmem:[%s228 + $0x24] sm:$0xf]
        %v312 = vld [vmem:[%s228 + $0x28] sm:$0xf]
        %v313 = vld [vmem:[%s228 + $0x2c] sm:$0xf]
        %v314 = vld [vmem:[%s228 + $0x30] sm:$0xf]
        %v315 = vld [vmem:[%s228 + $0x34] sm:$0xf]
        %v316 = vld [vmem:[%s228 + $0x38] sm:$0xf]
        %v317 = vld [vmem:[%s228 + $0x3c] sm:$0xf]
        %v318 = vld [vmem:[%s228 + $0x40] sm:$0xf]
        %v319 = vld [vmem:[%s228 + $0x44] sm:$0xf]
        %v320 = vld [vmem:[%s228 + $0x48] sm:$0xf]
        %v321 = vld [vmem:[%s228 + $0x4c] sm:$0xf]
        %v322 = vld [vmem:[%s228 + $0x50] sm:$0xf]
        %v323 = vld [vmem:[%s228 + $0x54] sm:$0xf]
        %v324 = vld [vmem:[%s228 + $0x58] sm:$0xf]
        %v325 = vld [vmem:[%s228 + $0x5c] sm:$0xf]
        %v326 = vld [vmem:[%s228 + $0x60] sm:$0xf]
        %v327 = vld [vmem:[%s228 + $0x64] sm:$0xf]
        %v328 = vld [vmem:[%s228 + $0x68] sm:$0xf]
        %v329 = vld [vmem:[%s228 + $0x6c] sm:$0xf]
        %v330 = vld [vmem:[%s228 + $0x70] sm:$0xf]
        %v331 = vld [vmem:[%s228 + $0x74] sm:$0xf]
        %v332 = vld [vmem:[%s228 + $0x78] sm:$0xf]
        %v333 = vld [vmem:[%s228 + $0x7c] sm:$0xf]
        %v334 = vld [vmem:[%s272] sm:$0x3]
        %v336 = vlaneseq
        %v337 = vshrl.u32 %v336, 7
        %v338 = vsub.s32 0, %v337
        %v339 = vrot.slane %v334, %v338
        %v340 = vlaneseq
        %v341 = vshrl.u32 %v340, 7
        %v342 = vsub.s32 1, %v341
        %v343 = vrot.slane %v334, %v342
        %v378 = vunpack.c.l.b16 %v302
        %v379 = vunpack.c.l.b16 %v303
        %v380 = vunpack.c.l.b16 %v304
        %v381 = vunpack.c.l.b16 %v305
        %v382 = vunpack.c.l.b16 %v306
        %v383 = vunpack.c.l.b16 %v307
        %v384 = vunpack.c.l.b16 %v308
        %v385 = vunpack.c.l.b16 %v309
        %v386 = vunpack.c.l.b16 %v310
        %v387 = vunpack.c.l.b16 %v311
        %v388 = vunpack.c.l.b16 %v312
        %v389 = vunpack.c.l.b16 %v313
        %v390 = vunpack.c.l.b16 %v314
        %v391 = vunpack.c.l.b16 %v315
        %v392 = vunpack.c.l.b16 %v316
        %v393 = vunpack.c.l.b16 %v317
        %v394 = vunpack.c.l.b16 %v318
        %v395 = vunpack.c.l.b16 %v319
        %v396 = vunpack.c.l.b16 %v320
        %v397 = vunpack.c.l.b16 %v321
        %v398 = vunpack.c.l.b16 %v322
        %v399 = vunpack.c.l.b16 %v323
        %v400 = vunpack.c.l.b16 %v324
        %v401 = vunpack.c.l.b16 %v325
        %v402 = vunpack.c.l.b16 %v326
        %v403 = vunpack.c.l.b16 %v327
        %v404 = vunpack.c.l.b16 %v328
        %v405 = vunpack.c.l.b16 %v329
        %v406 = vunpack.c.l.b16 %v330
        %v407 = vunpack.c.l.b16 %v331
        %v408 = vunpack.c.l.b16 %v332
        %v409 = vunpack.c.l.b16 %v333
        %v410 = vpack.c.b16 %v379, %v378
        %v411 = vpack.c.b16 %v381, %v380
        %v412 = vpack.c.b16 %v383, %v382
        %v413 = vpack.c.b16 %v385, %v384
        %v414 = vpack.c.b16 %v387, %v386
        %v415 = vpack.c.b16 %v389, %v388
        %v416 = vpack.c.b16 %v391, %v390
        %v417 = vpack.c.b16 %v393, %v392
        %v418 = vpack.c.b16 %v395, %v394
        %v419 = vpack.c.b16 %v397, %v396
        %v420 = vpack.c.b16 %v399, %v398
        %v421 = vpack.c.b16 %v401, %v400
        %v422 = vpack.c.b16 %v403, %v402
        %v423 = vpack.c.b16 %v405, %v404
        %v424 = vpack.c.b16 %v407, %v406
        %v425 = vpack.c.b16 %v409, %v408
        %442 = vmatprep.subr.bf16.mxu0 0
        %443 = vmatpush1.bf16.xpose.msra.mxu0 %v410
        %444 = vmatprep.subr.bf16.mxu0 0
        %445 = vmatpush1.bf16.xpose.msra.mxu0 %v411
        %446 = vmatprep.subr.bf16.mxu0 0
        %447 = vmatpush1.bf16.xpose.msra.mxu0 %v412
        %448 = vmatprep.subr.bf16.mxu0 0
        %449 = vmatpush1.bf16.xpose.msra.mxu0 %v413
        %450 = vmatprep.subr.bf16.mxu0 0
        %451 = vmatpush1.bf16.xpose.msra.mxu0 %v414
        %452 = vmatprep.subr.bf16.mxu0 0
        %453 = vmatpush1.bf16.xpose.msra.mxu0 %v415
        %454 = vmatprep.subr.bf16.mxu0 0
        %455 = vmatpush1.bf16.xpose.msra.mxu0 %v416
        %456 = vmatprep.subr.bf16.mxu0 0
        %457 = vmatpush1.bf16.xpose.msra.mxu0 %v417
        %458 = vmatprep.subr.bf16.mxu0 0
        %459 = vmatpush1.bf16.xpose.msra.mxu0 %v418
        %460 = vmatprep.subr.bf16.mxu0 0
        %461 = vmatpush1.bf16.xpose.msra.mxu0 %v419
        %462 = vmatprep.subr.bf16.mxu0 0
        %463 = vmatpush1.bf16.xpose.msra.mxu0 %v420
        %464 = vmatprep.subr.bf16.mxu0 0
        %465 = vmatpush1.bf16.xpose.msra.mxu0 %v421
        %466 = vmatprep.subr.bf16.mxu0 0
        %467 = vmatpush1.bf16.xpose.msra.mxu0 %v422
        %468 = vmatprep.subr.bf16.mxu0 0
        %469 = vmatpush1.bf16.xpose.msra.mxu0 %v423
        %470 = vmatprep.subr.bf16.mxu0 0
        %471 = vmatpush1.bf16.xpose.msra.mxu0 %v424
        %472 = vmatprep.subr.bf16.mxu0 0
        %473 = vmatpush1.bf16.xpose.msra.mxu0 %v425
        %474 = vmatprep.mubr.bf16.mxu0 0
        %475 = vmatmul.mubr.bf16.gmra.mrb[0].mxu0 %v301
        %v476 = vpop.f32.mrb[0].mxu0
        %v477 = vadd.f32 %v339, %v476
        %v478 = vpop.f32.mrb[0].mxu0
        %v479 = vadd.f32 %v343, %v478
        %v480 = vpop.f32.mrb[0].mxu0
        %v481 = vpop.f32.mrb[0].mxu0
        %482 = vdwg.mxu0
        %v483 = vlaneseq
        %v484 = vand.u32 %v483, 127
        %v485 = vadd.s32 %v484, 128
        %v486 = vld [vmem:[%s277] sm:$0xff]
        %s487 = smul.u32 %s23, 256
        %v488 = vstv %s487
        %v489 = vsub.s32 %v486, %v488
        %v490 = vmax.f32 %v477, %v479
        %491 = vmax.xlane.f32.xlu0 %v490
        %v492 = vpop.xlane.xlu0 %491
        %v493 = vld [vmem:[#allocation3] sm:$0xff]
        %v494 = vmax.f32 %v493, %v492
        %v495 = vld [vmem:[#allocation4] sm:$0xff]
        %v496 = vsub.f32 %v493, %v494
        %v497 = vmul.f32 %v496, 1.442695
        %v498 = vpow.pop %v497
        %v499 = vmul.f32 %v495, %v498
        %501 = vset.pattern.permute.xlu0 0
        %502 = vperm.xlu0 %501, %v494
        %v503 = vpop.permute.xlu0 %502
        %v505 = vsub.f32 %v477, %v503
        %v506 = vsub.f32 %v479, %v503
        %v507 = vmul.f32 %v505, 1.442695
        %v508 = vpow.pop %v507
        %v509 = vmul.f32 %v506, 1.442695
        %v510 = vpow.pop %v509
        %v511 = vadd.f32 %v508, %v510
        %512 = vadd.xlane.f32.xlu0 %v511
        %v513 = vpop.xlane.xlu0 %512
        %v514 = vadd.f32 %v499, %v513
        %vm515 = vcmask 7168
        %516 = vst.msk [vmem:[#allocation4] sm:$0xff] %vm515, %v514
        %v517 = vld [vmem:[#allocation5] sm:$0xff]
        %518 = vset.pattern.permute.xlu0 0
        %519 = vperm.xlu0 %518, %v489
        %v520 = vpop.permute.xlu0 %519
        %vm521 = vcmp.eq.s32.totalorder %v484, %v520
        %vm522 = vcmp.eq.s32.totalorder %v485, %v520
        %v523 = vsel %vm521, %v477, 0.0
        %v524 = vsel %vm522, %v479, 0.0
        %v525 = vadd.f32 %v523, %v524
        %526 = vadd.xlane.f32.xlu0 %v525
        %v527 = vpop.xlane.xlu0 %526
        %v528 = vadd.f32 %v517, %v527
        %529 = vst.msk [vmem:[#allocation5] sm:$0xff] %vm515, %v528
        %vm530 = vcmp.eq.f32.partialorder %v477, %v492
        %vm531 = vcmp.eq.f32.partialorder %v479, %v492
        %v532 = vsel %vm530, %v484, 2147483647
        %v533 = vsel %vm531, %v485, 2147483647
        %vm534 = vcmp.lt.s32.totalorder %v532, %v533
        %v535 = vsel %vm534, %v532, %v533
        %v536 = vand.u32 %v535, 65535
        %v537 = vshra.s32 %v535, 16
        %v538 = vcvt.s32.f32 %v536
        %v539 = vcvt.s32.f32 %v537
        %540 = vmin.xlane.f32.xlu0 %v539
        %v541 = vpop.xlane.xlu0 %540
        %vm542 = vcmp.eq.f32.partialorder %v539, %v541
        %v543 = vsel %vm542, %v538, inf
        %544 = vmin.xlane.f32.xlu0 %v543
        %v545 = vpop.xlane.xlu0 %544
        %v546 = vcvt.f32.s32 %v545
        %v547 = vcvt.f32.s32 %v541
        %v548 = vshll.u32 %v547, 16
        %v549 = vadd.s32 %v548, %v546
        %v550 = vadd.s32 %v549, %v488
        %vm551 = vcmp.gt.f32.partialorder %v492, %v493
        %v552 = vld [vmem:[#allocation6] sm:$0xff]
        %v553 = vsel %vm551, %v550, %v552
        %554 = vst.msk [vmem:[#allocation6] sm:$0xff] %vm515, %v553
        %555 = vst.msk [vmem:[#allocation3] sm:$0xff] %vm515, %v494
        %p556 = scmp.eq.s32.totalorder %s23, 1
        // Predicated region
        $region45: #{tpu_custom_call.1} parent=35 // pred_check
          %p557 = pneg %p556
        $region46: #{tpu_custom_call.1} parent=35 // pred_check_branch
          %559 = sbr.rel (%p557) target = $region48
        $region47: #{tpu_custom_call.1} parent=35 // pred_region
          %v560 = vld [vmem:[#allocation3] sm:$0xff]
          %v561 = vld [vmem:[#allocation4] sm:$0xff]
          %v562 = vlog2.pop %v561
          %v563 = vmul.f32 %v562, 0.6931472
          %v564 = vadd.f32 %v560, %v563
          %v565 = vld [vmem:[#allocation5] sm:$0xff]
          %v566 = vsub.f32 %v564, %v565
          %v567 = vld [vmem:[#allocation6] sm:$0xff]
          %v568 = vld [vmem:[%s277] sm:$0xff]
          %vm569 = vcmp.eq.s32.totalorder %v567, %v568
          %v570 = vsel %vm569, 1, 0
          %v571 = vcvt.s32.f32 %v570
          %573 = vrot.lane.b32.xlu0 %v571, 1
          %v574 = vpop.permute.xlu0 %573
          %v576 = vsel %vm515, %v566, %v574
          %vm577 = vcmask 15360
          %578 = vst.msk [vmem:[%s281] sm:$0xff] %vm577, %v576
        $region48: #{tpu_custom_call.1} parent=35 // pred_fallthru
          _
        %p579 = scmp.lt.s32.totalorder %s22, 1
        %s580 = scalar_select %p579, %s22, 1
        %s581 = smul.addr %s580, 8
        %s582 = scalar_lea.vmem %s4, %s581
        // Predicated region
        $region49: #{tpu_custom_call.1} parent=35 // pred_check
          %p583 = pneg %p152
        $region50: #{tpu_custom_call.1} parent=35 // pred_check_branch
          %585 = sbr.rel (%p583) target = $region52
        $region51: #{tpu_custom_call.1} parent=35 // pred_region
          _
        $region52: #{tpu_custom_call.1} parent=35 // pred_fallthru
          _
      $region36: #{tpu_custom_call.1} parent=5 // pred_fallthru
        _
      %p586 = scmp.le.s32.totalorder 2, %s13
      // Predicated region
      $region53: #{tpu_custom_call.1} parent=5 // pred_check
        %p587 = pneg %p586
      $region54: #{tpu_custom_call.1} parent=5 // pred_check_branch
        %589 = sbr.rel (%p587) target = $region56
      $region55: #{tpu_custom_call.1} parent=5 // pred_region
        %s590 = ssub.s32 %s13, 2
        // Predicated region
        $region57: #{tpu_custom_call.1} parent=55 // pred_check
          %p591 = pneg %p158
        $region58: #{tpu_custom_call.1} parent=55 // pred_check_branch
          %593 = sbr.rel (%p591) target = $region60
        $region59: #{tpu_custom_call.1} parent=55 // pred_region
          %p594 = scmp.lt.s32.totalorder %s24, 1
          %s595 = scalar_select %p594, %s24, 1
          %s596 = smul.addr %s595, 8
          %s597 = scalar_lea.vmem %s4, %s596
        $region60: #{tpu_custom_call.1} parent=55 // pred_fallthru
          _
      $region56: #{tpu_custom_call.1} parent=5 // pred_fallthru
        _
    $region6: #{tpu_custom_call.1} parent=1 // loop_footer
      %s17 = sadd.s32 1, %s13
    $region7: #{tpu_custom_call.1} parent=1 // loop_footer_branch
      %12 = sbr.rel target = $region3
    $region8: #{tpu_custom_call.1} parent=1 // loop_exit
      _
    %598 = vsyncpa [#allocation8], 1
    %s599 = scalar_lea.sflag [#allocation8], 1
    %600 = vsyncpa %s599, 1

</llo_original>
